<compile_context>
chip_gen: v7x
topology: tpu7x:2x2x1
jax: 0.10.0
libtpu: 0.0.40
codegen_flags: <defaults>
</compile_context>

<pallas_src>
import numpy as np
import jax
import jax.numpy as jnp
from jax.experimental import pallas as pl
from jax.experimental.pallas import tpu as pltpu

# ---- hyper-parameters from the PyTorch module ----
IN_CHANNELS = 14
OUT_CHANNELS = 10
KERNEL_SIZE = 3
STRIDE = 2          # padding = 0 -> VALID convolution
POOL1 = 20          # AdaptiveMaxPool1d(20)
POOL2 = 15          # AdaptiveAvgPool1d(15)
POOL3 = 10          # AdaptiveAvgPool1d(10)

BATCH = 2
SEQ_LEN = 64


def conv_out_len(L, k=KERNEL_SIZE, s=STRIDE):
    return (L - k) // s + 1


L1 = conv_out_len(SEQ_LEN)   # 31


def _adaptive_window(i, L_in, L_out):
    start = (i * L_in) // L_out
    end = -(-((i + 1) * L_in) // L_out)   # ceil
    return start, end


# Max window size of the adaptive max-pool (31 -> 20): number of select matmuls needed.
KMAX = max(_adaptive_window(i, L1, POOL1)[1] - _adaptive_window(i, L1, POOL1)[0]
           for i in range(POOL1))
NPLANES = max(KERNEL_SIZE, KMAX)

BC_IN = BATCH * IN_CHANNELS     # 28
BC_OUT = BATCH * OUT_CHANNELS   # 20


def _align8(n):
    return ((n + 7) // 8) * 8


# ---- constant-slab row layout (all starts sublane-aligned) ----
ROW_S1T = 0                                   # (K, SEQ_LEN, L1)   conv1 tap-select
ROW_WBD = _align8(ROW_S1T + SEQ_LEN)          # (K, BC_OUT, BC_IN) block-diag conv1 weight
ROW_MXT = _align8(ROW_WBD + BC_OUT)           # (KMAX, L1, POOL1)  max-pool selects
ROW_WF = _align8(ROW_MXT + L1)                # (BC_OUT, POOL1)    fused tail weight (tiled)
ROW_RSEL = _align8(ROW_WF + BC_OUT)           # (BATCH, BC_OUT)    per-sample row selector
ROW_BF = ROW_RSEL + BATCH                     # (1, 1)             fused scalar bias
SLAB_ROWS = _align8(ROW_BF + 1)
SLAB_LANES = 128
OUT_LANES = 128


# ---------------------------- host-side numpy constants ----------------------------
def _conv1_select_mats():
    """S1T[k, j, t] = 1 iff j == STRIDE*t + k  (strided patch extraction, right-mult)."""
    s = np.zeros((KERNEL_SIZE, SEQ_LEN, L1), np.float32)
    for k in range(KERNEL_SIZE):
        for t in range(L1):
            s[k, STRIDE * t + k, t] = 1.0
    return s


def _maxpool_select_mats():
    """MXT[m, j, i] = 1 iff j == clamp(start_i + m, window_i);  max_m covers each window."""
    m = np.zeros((KMAX, L1, POOL1), np.float32)
    for i in range(POOL1):
        st, en = _adaptive_window(i, L1, POOL1)
        for j in range(KMAX):
            m[j, min(st + j, en - 1), i] = 1.0
    return m


_S1T_NP = _conv1_select_mats()
_MXT_NP = _maxpool_select_mats()


# ---------------------------------- Pallas kernel ----------------------------------
def cnn_kernel(x_ref, c_ref, o_ref):
    x = x_ref[...]                                               # (BC_IN, SEQ_LEN) f32

    # conv1 (stride 2, VALID, bias folded into the fused scalar bias):
    #   acc[n*Cout+co, t] = sum_k sum_ci w1[co, ci, k] * x[n*Cin+ci, 2t+k]
    def conv1_tap(k):
        wbd_k = c_ref[k, ROW_WBD:ROW_WBD + BC_OUT, 0:BC_IN]      # (20, 28)
        s1t_k = c_ref[k, ROW_S1T:ROW_S1T + SEQ_LEN, 0:L1]        # (64, 31)
        wx = jnp.dot(wbd_k, x, preferred_element_type=jnp.float32)        # (20, 64)
        return jnp.dot(wx, s1t_k, preferred_element_type=jnp.float32)     # (20, 31)

    acc = conv1_tap(0)
    for k in range(1, KERNEL_SIZE):
        acc = acc + conv1_tap(k)

    # AdaptiveMaxPool1d(20): max over KMAX shifted/clamped select matmuls.
    hm = jnp.dot(acc, c_ref[0, ROW_MXT:ROW_MXT + L1, 0:POOL1],
                 preferred_element_type=jnp.float32)             # (20, 20)
    for m in range(1, KMAX):
        cand = jnp.dot(acc, c_ref[m, ROW_MXT:ROW_MXT + L1, 0:POOL1],
                       preferred_element_type=jnp.float32)
        hm = jnp.maximum(hm, cand)

    # Fused affine tail (conv2 -> avgpool15 -> conv3 -> avgpool10 -> fc):
    #   out[n] = sum_{c,l} hm[n*Cout+c, l] * wf[c, l] + bf
    wf = c_ref[0, ROW_WF:ROW_WF + BC_OUT, 0:POOL1]               # (20, 20) (wf tiled over batch)
    rsel = c_ref[0, ROW_RSEL:ROW_RSEL + BATCH, 0:BC_OUT]         # (2, 20)
    bf = c_ref[0, ROW_BF:ROW_BF + 1, 0:1]                        # (1, 1)

    p = hm * wf                                                  # (20, 20) VPU
    per_sample = jnp.dot(rsel, p, preferred_element_type=jnp.float32)     # (2, 20)
    ones_bcast = jnp.ones((POOL1, OUT_LANES), jnp.float32)
    # Lane-dense store: every lane of row n holds sample n's result.
    o_ref[...] = jnp.dot(per_sample, ones_bcast,
                         preferred_element_type=jnp.float32) + bf         # (2, 128)


# ------------------------ reference pieces (also used for folding) ------------------------
def _ref_conv1d(x_ncl, w, b):
    out = jax.lax.conv_general_dilated(
        x_ncl, w, window_strides=(STRIDE,), padding="VALID",
        dimension_numbers=("NCH", "OIH", "NCH"),
        preferred_element_type=jnp.float32)
    return out + b[None, :, None]


def _ref_adaptive_pool(x_ncl, out_size, mode):
    L_in = x_ncl.shape[-1]
    cols = []
    for i in range(out_size):
        s, e = _adaptive_window(i, L_in, out_size)
        win = x_ncl[:, :, s:e]
        cols.append(win.max(axis=-1) if mode == "max" else win.mean(axis=-1))
    return jnp.stack(cols, axis=-1)


def _tail_scalar(hm_cl, p):
    """Affine map: one sample's max-pool output (Cout, POOL1) -> fc scalar output."""
    h = hm_cl[None]                                              # (1, C, 20)
    h = _ref_conv1d(h, p["w2"], p["b2"])
    h = _ref_adaptive_pool(h, POOL2, "avg")
    h = _ref_conv1d(h, p["w3"], p["b3"])
    h = _ref_adaptive_pool(h, POOL3, "avg")
    flat = h.reshape(1, -1)                                      # channel-major flatten
    return (flat @ p["fcw"].T + p["fcb"][None, :])[0, 0]


def _build_const_slab(params):
    f32 = jnp.float32
    w1 = params["w1"].astype(f32)                                # (Cout, Cin, K)
    eye_b = jnp.eye(BATCH, dtype=f32)
    wbd = jnp.stack([jnp.kron(eye_b, w1[:, :, k])                # (K, 20, 28) block-diag
                     for k in range(KERNEL_SIZE)])

    # Tail is affine in the max-pool output: wf = linear part (grad at 0), b_tail = value at 0.
    zeros_hm = jnp.zeros((OUT_CHANNELS, POOL1), f32)
    b_tail = _tail_scalar(zeros_hm, params)
    wf = jax.grad(_tail_scalar)(zeros_hm, params)                # (Cout, POOL1)
    # conv1 bias commutes with the max-pool -> fold into the scalar bias too.
    bf_total = b_tail + jnp.sum(wf * params["b1"].astype(f32)[:, None])
    wf_tiled = jnp.tile(wf, (BATCH, 1))                          # (20, 20)
    rsel = jnp.kron(eye_b, jnp.ones((1, OUT_CHANNELS), f32))     # (2, 20)

    slab = jnp.zeros((NPLANES, SLAB_ROWS, SLAB_LANES), f32)
    slab = slab.at[:KERNEL_SIZE, ROW_S1T:ROW_S1T + SEQ_LEN, 0:L1].set(jnp.asarray(_S1T_NP))
    slab = slab.at[:KERNEL_SIZE, ROW_WBD:ROW_WBD + BC_OUT, 0:BC_IN].set(wbd)
    slab = slab.at[:KMAX, ROW_MXT:ROW_MXT + L1, 0:POOL1].set(jnp.asarray(_MXT_NP))
    slab = slab.at[0, ROW_WF:ROW_WF + BC_OUT, 0:POOL1].set(wf_tiled)
    slab = slab.at[0, ROW_RSEL:ROW_RSEL + BATCH, 0:BC_OUT].set(rsel)
    slab = slab.at[0, ROW_BF, 0].set(bf_total)
    return slab


# ------------------------------------ wrapper ------------------------------------
def init_params(key):
    ks = jax.random.split(key, 8)

    def u(k, shape, fan_in):
        bound = 1.0 / float(np.sqrt(fan_in))
        return jax.random.uniform(k, shape, jnp.float32, -bound, bound)

    return dict(
        w1=u(ks[0], (OUT_CHANNELS, IN_CHANNELS, KERNEL_SIZE), IN_CHANNELS * KERNEL_SIZE),
        b1=u(ks[1], (OUT_CHANNELS,), IN_CHANNELS * KERNEL_SIZE),
        w2=u(ks[2], (OUT_CHANNELS, OUT_CHANNELS, KERNEL_SIZE), OUT_CHANNELS * KERNEL_SIZE),
        b2=u(ks[3], (OUT_CHANNELS,), OUT_CHANNELS * KERNEL_SIZE),
        w3=u(ks[4], (OUT_CHANNELS, OUT_CHANNELS, KERNEL_SIZE), OUT_CHANNELS * KERNEL_SIZE),
        b3=u(ks[5], (OUT_CHANNELS,), OUT_CHANNELS * KERNEL_SIZE),
        fcw=u(ks[6], (1, OUT_CHANNELS * POOL3), OUT_CHANNELS * POOL3),
        fcb=u(ks[7], (1,), OUT_CHANNELS * POOL3),
    )


@jax.jit
def cnn_forward(x_ncl, params):
    # x_ncl: (N, C_in, L) float32, PyTorch NCL layout.
    assert x_ncl.shape == (BATCH, IN_CHANNELS, SEQ_LEN)
    x_cl = x_ncl.reshape(BC_IN, SEQ_LEN).astype(jnp.float32)     # batch-stacked (C, L); no transpose
    const = _build_const_slab(params)

    out = pl.pallas_call(
        cnn_kernel,
        out_shape=jax.ShapeDtypeStruct((BATCH, OUT_LANES), jnp.float32),
        in_specs=[pl.BlockSpec(memory_space=pltpu.MemorySpace.VMEM),
                  pl.BlockSpec(memory_space=pltpu.MemorySpace.VMEM)],
        out_specs=pl.BlockSpec(memory_space=pltpu.MemorySpace.VMEM),
    )(x_cl, const)
    return out[:, :1]                                            # (N, 1)


# ------------------------------ pure-JAX reference ------------------------------
def cnn_forward_ref(x_ncl, p):
    h = _ref_conv1d(x_ncl, p["w1"], p["b1"])
    h = _ref_adaptive_pool(h, POOL1, "max")
    h = _ref_conv1d(h, p["w2"], p["b2"])
    h = _ref_adaptive_pool(h, POOL2, "avg")
    h = _ref_conv1d(h, p["w3"], p["b3"])
    h = _ref_adaptive_pool(h, POOL3, "avg")
    flat = h.reshape(h.shape[0], -1)
    return flat @ p["fcw"].T + p["fcb"][None, :]


if __name__ == "__main__":
    key = jax.random.PRNGKey(0)
    k_x, k_p = jax.random.split(key)
    x = jax.random.normal(k_x, (BATCH, IN_CHANNELS, SEQ_LEN), jnp.float32)
    params = init_params(k_p)

    out = cnn_forward(x, params)
    jax.block_until_ready(out)
    assert out.shape == (BATCH, 1)

    ref = cnn_forward_ref(x, params)
    np.testing.assert_allclose(np.asarray(out), np.asarray(ref), rtol=2e-2, atol=2e-2)

    print("KERNEL_OK")
</pallas_src>

<mosaic_0001>
module attributes {stable_mosaic.version = 11 : i64} {
  func.func @cnn_kernel(%arg0: memref<28x64xf32, #tpu.memory_space<vmem>>, %arg1: memref<3x152x128xf32, #tpu.memory_space<vmem>>, %arg2: memref<2x128xf32, #tpu.memory_space<vmem>>) attributes {dimension_semantics = [], scalar_prefetch = 0 : i64, scratch_operands = 0 : i64, tpu.core_type = #tpu.core_type<tc>} {
    %c0 = arith.constant 0 : index
    %c0_0 = arith.constant 0 : index
    %0 = vector.load %arg0[%c0, %c0_0] : memref<28x64xf32, #tpu.memory_space<vmem>>, vector<28x64xf32>
    %c0_1 = arith.constant 0 : index
    %c64 = arith.constant 64 : index
    %c0_2 = arith.constant 0 : index
    %1 = vector.load %arg1[%c0_1, %c64, %c0_2] : memref<3x152x128xf32, #tpu.memory_space<vmem>>, vector<1x20x28xf32>
    %2 = vector.shape_cast %1 : vector<1x20x28xf32> to vector<20x28xf32>
    %c0_3 = arith.constant 0 : index
    %c0_4 = arith.constant 0 : index
    %c0_5 = arith.constant 0 : index
    %3 = vector.load %arg1[%c0_3, %c0_4, %c0_5] : memref<3x152x128xf32, #tpu.memory_space<vmem>>, vector<1x64x31xf32>
    %4 = vector.shape_cast %3 : vector<1x64x31xf32> to vector<64x31xf32>
    %cst = arith.constant dense<0.000000e+00> : vector<20x64xf32>
    %5 = tpu.matmul %2, %0, %cst {dimension_numbers = #tpu.dot_dimension_numbers<[1], [0], [0], [1], [0, 0, 1, 1], [], []>} : vector<20x28xf32>, vector<28x64xf32>, vector<20x64xf32> -> vector<20x64xf32>
    %cst_6 = arith.constant dense<0.000000e+00> : vector<20x31xf32>
    %6 = tpu.matmul %5, %4, %cst_6 {dimension_numbers = #tpu.dot_dimension_numbers<[1], [0], [0], [1], [0, 0, 1, 1], [], []>} : vector<20x64xf32>, vector<64x31xf32>, vector<20x31xf32> -> vector<20x31xf32>
    %c1 = arith.constant 1 : index
    %c64_7 = arith.constant 64 : index
    %c0_8 = arith.constant 0 : index
    %7 = vector.load %arg1[%c1, %c64_7, %c0_8] : memref<3x152x128xf32, #tpu.memory_space<vmem>>, vector<1x20x28xf32>
    %8 = vector.shape_cast %7 : vector<1x20x28xf32> to vector<20x28xf32>
    %c1_9 = arith.constant 1 : index
    %c0_10 = arith.constant 0 : index
    %c0_11 = arith.constant 0 : index
    %9 = vector.load %arg1[%c1_9, %c0_10, %c0_11] : memref<3x152x128xf32, #tpu.memory_space<vmem>>, vector<1x64x31xf32>
    %10 = vector.shape_cast %9 : vector<1x64x31xf32> to vector<64x31xf32>
    %cst_12 = arith.constant dense<0.000000e+00> : vector<20x64xf32>
    %11 = tpu.matmul %8, %0, %cst_12 {dimension_numbers = #tpu.dot_dimension_numbers<[1], [0], [0], [1], [0, 0, 1, 1], [], []>} : vector<20x28xf32>, vector<28x64xf32>, vector<20x64xf32> -> vector<20x64xf32>
    %cst_13 = arith.constant dense<0.000000e+00> : vector<20x31xf32>
    %12 = tpu.matmul %11, %10, %cst_13 {dimension_numbers = #tpu.dot_dimension_numbers<[1], [0], [0], [1], [0, 0, 1, 1], [], []>} : vector<20x64xf32>, vector<64x31xf32>, vector<20x31xf32> -> vector<20x31xf32>
    %13 = arith.addf %6, %12 : vector<20x31xf32>
    %c2 = arith.constant 2 : index
    %c64_14 = arith.constant 64 : index
    %c0_15 = arith.constant 0 : index
    %14 = vector.load %arg1[%c2, %c64_14, %c0_15] : memref<3x152x128xf32, #tpu.memory_space<vmem>>, vector<1x20x28xf32>
    %15 = vector.shape_cast %14 : vector<1x20x28xf32> to vector<20x28xf32>
    %c2_16 = arith.constant 2 : index
    %c0_17 = arith.constant 0 : index
    %c0_18 = arith.constant 0 : index
    %16 = vector.load %arg1[%c2_16, %c0_17, %c0_18] : memref<3x152x128xf32, #tpu.memory_space<vmem>>, vector<1x64x31xf32>
    %17 = vector.shape_cast %16 : vector<1x64x31xf32> to vector<64x31xf32>
    %cst_19 = arith.constant dense<0.000000e+00> : vector<20x64xf32>
    %18 = tpu.matmul %15, %0, %cst_19 {dimension_numbers = #tpu.dot_dimension_numbers<[1], [0], [0], [1], [0, 0, 1, 1], [], []>} : vector<20x28xf32>, vector<28x64xf32>, vector<20x64xf32> -> vector<20x64xf32>
    %cst_20 = arith.constant dense<0.000000e+00> : vector<20x31xf32>
    %19 = tpu.matmul %18, %17, %cst_20 {dimension_numbers = #tpu.dot_dimension_numbers<[1], [0], [0], [1], [0, 0, 1, 1], [], []>} : vector<20x64xf32>, vector<64x31xf32>, vector<20x31xf32> -> vector<20x31xf32>
    %20 = arith.addf %13, %19 : vector<20x31xf32>
    %c0_21 = arith.constant 0 : index
    %c88 = arith.constant 88 : index
    %c0_22 = arith.constant 0 : index
    %21 = vector.load %arg1[%c0_21, %c88, %c0_22] : memref<3x152x128xf32, #tpu.memory_space<vmem>>, vector<1x31x20xf32>
    %22 = vector.shape_cast %21 : vector<1x31x20xf32> to vector<31x20xf32>
    %cst_23 = arith.constant dense<0.000000e+00> : vector<20x20xf32>
    %23 = tpu.matmul %20, %22, %cst_23 {dimension_numbers = #tpu.dot_dimension_numbers<[1], [0], [0], [1], [0, 0, 1, 1], [], []>} : vector<20x31xf32>, vector<31x20xf32>, vector<20x20xf32> -> vector<20x20xf32>
    %c1_24 = arith.constant 1 : index
    %c88_25 = arith.constant 88 : index
    %c0_26 = arith.constant 0 : index
    %24 = vector.load %arg1[%c1_24, %c88_25, %c0_26] : memref<3x152x128xf32, #tpu.memory_space<vmem>>, vector<1x31x20xf32>
    %25 = vector.shape_cast %24 : vector<1x31x20xf32> to vector<31x20xf32>
    %cst_27 = arith.constant dense<0.000000e+00> : vector<20x20xf32>
    %26 = tpu.matmul %20, %25, %cst_27 {dimension_numbers = #tpu.dot_dimension_numbers<[1], [0], [0], [1], [0, 0, 1, 1], [], []>} : vector<20x31xf32>, vector<31x20xf32>, vector<20x20xf32> -> vector<20x20xf32>
    %27 = arith.maximumf %23, %26 : vector<20x20xf32>
    %c2_28 = arith.constant 2 : index
    %c88_29 = arith.constant 88 : index
    %c0_30 = arith.constant 0 : index
    %28 = vector.load %arg1[%c2_28, %c88_29, %c0_30] : memref<3x152x128xf32, #tpu.memory_space<vmem>>, vector<1x31x20xf32>
    %29 = vector.shape_cast %28 : vector<1x31x20xf32> to vector<31x20xf32>
    %cst_31 = arith.constant dense<0.000000e+00> : vector<20x20xf32>
    %30 = tpu.matmul %20, %29, %cst_31 {dimension_numbers = #tpu.dot_dimension_numbers<[1], [0], [0], [1], [0, 0, 1, 1], [], []>} : vector<20x31xf32>, vector<31x20xf32>, vector<20x20xf32> -> vector<20x20xf32>
    %31 = arith.maximumf %27, %30 : vector<20x20xf32>
    %c0_32 = arith.constant 0 : index
    %c120 = arith.constant 120 : index
    %c0_33 = arith.constant 0 : index
    %32 = vector.load %arg1[%c0_32, %c120, %c0_33] : memref<3x152x128xf32, #tpu.memory_space<vmem>>, vector<1x20x20xf32>
    %33 = vector.shape_cast %32 : vector<1x20x20xf32> to vector<20x20xf32>
    %c0_34 = arith.constant 0 : index
    %c144 = arith.constant 144 : index
    %c0_35 = arith.constant 0 : index
    %34 = vector.load %arg1[%c0_34, %c144, %c0_35] : memref<3x152x128xf32, #tpu.memory_space<vmem>>, vector<1x2x20xf32>
    %35 = vector.shape_cast %34 : vector<1x2x20xf32> to vector<2x20xf32>
    %c0_36 = arith.constant 0 : index
    %c146 = arith.constant 146 : index
    %c0_37 = arith.constant 0 : index
    %36 = vector.load %arg1[%c0_36, %c146, %c0_37] : memref<3x152x128xf32, #tpu.memory_space<vmem>>, vector<1x1x1xf32>
    %37 = vector.shape_cast %36 : vector<1x1x1xf32> to vector<1x1xf32>
    %38 = arith.mulf %31, %33 : vector<20x20xf32>
    %cst_38 = arith.constant dense<0.000000e+00> : vector<2x20xf32>
    %39 = tpu.matmul %35, %38, %cst_38 {dimension_numbers = #tpu.dot_dimension_numbers<[1], [0], [0], [1], [0, 0, 1, 1], [], []>} : vector<2x20xf32>, vector<20x20xf32>, vector<2x20xf32> -> vector<2x20xf32>
    %cst_39 = arith.constant 1.000000e+00 : f32
    %40 = vector.broadcast %cst_39 : f32 to vector<20x128xf32>
    %cst_40 = arith.constant dense<0.000000e+00> : vector<2x128xf32>
    %41 = tpu.matmul %39, %40, %cst_40 {dimension_numbers = #tpu.dot_dimension_numbers<[1], [0], [0], [1], [0, 0, 1, 1], [], []>} : vector<2x20xf32>, vector<20x128xf32>, vector<2x128xf32> -> vector<2x128xf32>
    %42 = vector.broadcast %37 : vector<1x1xf32> to vector<2x128xf32>
    %43 = arith.addf %41, %42 : vector<2x128xf32>
    %c0_41 = arith.constant 0 : index
    %c0_42 = arith.constant 0 : index
    %44 = vector.load %arg2[%c0_41, %c0_42] : memref<2x128xf32, #tpu.memory_space<vmem>>, vector<2x128xf32>
    tpu.vector_store %arg2[%c0_41, %c0_42], %43 {strides = array<i32>} : memref<2x128xf32, #tpu.memory_space<vmem>>, vector<2x128xf32>,
    return
  }
}

</mosaic_0001>

<llo_original>
// kernel: cnn_forward.1
$region0: #{cnn_forward.1}
  #allocation0 [shape = 'u32[]', space=smem, size = 0x4, offset = 0x4, fixed_abs, tag = 'smem constant byte address 0x4 - core index']
  #allocation1 [shape = 'u32[144,128]{1,0:T(1,128)}', space=vmem, size = 0x12000, scoped, tag = 'internal scratch']
  %s0 = inlined_call_operand.vmem [shape: f32[28,64], index: 0, kind: input, shape index: {}]
  %s1 = inlined_call_operand.vmem [shape: f32[3,152,128], index: 1, kind: input, shape index: {}]
  %s2 = inlined_call_operand.vmem [shape: f32[2,128], index: 2, kind: output, shape index: {}]
  %s3 = sld [smem:[#allocation0]]
  $region18: #{cnn_forward.1} parent=0
    _
  %s5 = ssub.s32 1, %s3
  %s6 = scalar_select 0, %s5, %s3
  // Predicated region
  $region2: #{cnn_forward.1} parent=0 // pred_check
    _
  $region3: #{cnn_forward.1} parent=0 // pred_check_branch
    %8 = sbr.rel (0) target = $region5
  $region4: #{cnn_forward.1} parent=0 // pred_region
    _
  $region5: #{cnn_forward.1} parent=0 // pred_fallthru
    _
  // Predicated region
  $region6: #{cnn_forward.1} parent=0 // pred_check
    _
  $region7: #{cnn_forward.1} parent=0 // pred_check_branch
    %10 = sbr.rel (0) target = $region9
  $region8: #{cnn_forward.1} parent=0 // pred_region
    _
  $region9: #{cnn_forward.1} parent=0 // pred_fallthru
    _
  %v11 = vld [vmem:[%s0] sm:$0xff]
  %v12 = vld [vmem:[%s0 + $0x8] sm:$0xff]
  %v13 = vld [vmem:[%s0 + $0x10] sm:$0xff]
  %v14 = vld [vmem:[%s0 + $0x18] sm:$0xf]
  %v15 = vld [vmem:[%s1 + $0x40] sm:$0xff]
  %v16 = vld [vmem:[%s1 + $0x48] sm:$0xff]
  %v17 = vld [vmem:[%s1 + $0x50] sm:$0xf]
  %v18 = vld [vmem:[%s1] sm:$0xff]
  %v19 = vld [vmem:[%s1 + $0x8] sm:$0xff]
  %v20 = vld [vmem:[%s1 + $0x10] sm:$0xff]
  %v21 = vld [vmem:[%s1 + $0x18] sm:$0xff]
  %v22 = vld [vmem:[%s1 + $0x20] sm:$0xff]
  %v23 = vld [vmem:[%s1 + $0x28] sm:$0xff]
  %v24 = vld [vmem:[%s1 + $0x30] sm:$0xff]
  %v25 = vld [vmem:[%s1 + $0x38] sm:$0xff]
  %vm26 = vcmask 228352
  %v28 = vsel %vm26, %v15, 0
  %v31 = vsel %vm26, %v16, 0
  %v34 = vsel %vm26, %v17, 0
  %vm36 = vcmask 1043456
  %v38 = vsel %vm36, %v14, 0
  %40 = vmatprep.subr.mxu0 0.0
  %41 = vmatpush1.msra.mxu0 %v11
  %42 = vmatprep.subr.mxu0 0.0
  %43 = vmatpush1.msra.mxu0 %v12
  %44 = vmatprep.subr.mxu0 0.0
  %45 = vmatpush1.msra.mxu0 %v13
  %46 = vmatprep.subr.mxu0 0.0
  %47 = vmatpush1.msra.mxu0 %v38
  %48 = vmatprep.subr.mxu0 0.0
  %49 = vmatpush1.msra.mxu0 0.0
  %50 = vmatprep.subr.mxu0 0.0
  %51 = vmatpush1.msra.mxu0 0.0
  %52 = vmatprep.subr.mxu0 0.0
  %53 = vmatpush1.msra.mxu0 0.0
  %54 = vmatprep.subr.mxu0 0.0
  %55 = vmatpush1.msra.mxu0 0.0
  %56 = vmatprep.subr.mxu0 0.0
  %57 = vmatpush1.msra.mxu0 0.0
  %58 = vmatprep.subr.mxu0 0.0
  %59 = vmatpush1.msra.mxu0 0.0
  %60 = vmatprep.subr.mxu0 0.0
  %61 = vmatpush1.msra.mxu0 0.0
  %62 = vmatprep.subr.mxu0 0.0
  %63 = vmatpush1.msra.mxu0 0.0
  %64 = vmatprep.subr.mxu0 0.0
  %65 = vmatpush1.msra.mxu0 0.0
  %66 = vmatprep.subr.mxu0 0.0
  %67 = vmatpush1.msra.mxu0 0.0
  %68 = vmatprep.subr.mxu0 0.0
  %69 = vmatpush1.msra.mxu0 0.0
  %70 = vmatprep.subr.mxu0 0.0
  %71 = vmatpush1.msra.mxu0 0.0
  %72 = vmatprep.subr.mxu0 0.0
  %73 = vmatpush1.msra.mxu0 0.0
  %74 = vmatprep.subr.mxu0 0.0
  %75 = vmatpush1.msra.mxu0 0.0
  %76 = vmatprep.subr.mxu0 0.0
  %77 = vmatpush1.msra.mxu0 0.0
  %78 = vmatprep.subr.mxu0 0.0
  %79 = vmatpush1.msra.mxu0 0.0
  %80 = vmatprep.subr.mxu0 0.0
  %81 = vmatpush1.msra.mxu0 0.0
  %82 = vmatprep.subr.mxu0 0.0
  %83 = vmatpush1.msra.mxu0 0.0
  %84 = vmatprep.subr.mxu0 0.0
  %85 = vmatpush1.msra.mxu0 0.0
  %86 = vmatprep.subr.mxu0 0.0
  %87 = vmatpush1.msra.mxu0 0.0
  %88 = vmatprep.subr.mxu0 0.0
  %89 = vmatpush1.msra.mxu0 0.0
  %90 = vmatprep.subr.mxu0 0.0
  %91 = vmatpush1.msra.mxu0 0.0
  %92 = vmatprep.subr.mxu0 0.0
  %93 = vmatpush1.msra.mxu0 0.0
  %94 = vmatprep.subr.mxu0 0.0
  %95 = vmatpush1.msra.mxu0 0.0
  %96 = vmatprep.subr.mxu0 0.0
  %97 = vmatpush1.msra.mxu0 0.0
  %98 = vmatprep.subr.mxu0 0.0
  %99 = vmatpush1.msra.mxu0 0.0
  %100 = vmatprep.subr.mxu0 0.0
  %101 = vmatpush1.msra.mxu0 0.0
  %102 = vmatprep.subr.mxu0 0.0
  %103 = vmatpush1.msra.mxu0 0.0
  %104 = vmatprep.mubr.f32.mxu0 0.0
  %105 = vmatmul.mubr.f32.gmra.mrb[0].mxu0 %v28
  %v106 = vpop.f32.mrb[0].mxu0
  %v107 = vadd.f32 0.0, %v106
  %v108 = vpop.f32.mrb[0].mxu0
  %109 = vmatprep.mubr.f32.mxu0 0.0
  %110 = vmatmul.mubr.f32.gmra.mrb[0].mxu0 %v31
  %v111 = vpop.f32.mrb[0].mxu0
  %v112 = vadd.f32 0.0, %v111
  %v113 = vpop.f32.mrb[0].mxu0
  %114 = vmatprep.mubr.f32.mxu0 0.0
  %115 = vmatmul.mubr.f32.gmra.mrb[0].mxu0 %v34
  %v116 = vpop.f32.mrb[0].mxu0
  %v117 = vadd.f32 0.0, %v116
  %v118 = vpop.f32.mrb[0].mxu0
  %119 = vdwg.mxu0
  %s120 = scalar_lea.vmem %s1, 152
  %v121 = vld [vmem:[%s120 + $0x40] sm:$0xff]
  %v122 = vld [vmem:[%s120 + $0x48] sm:$0xff]
  %v123 = vld [vmem:[%s120 + $0x50] sm:$0xf]
  %v124 = vld [vmem:[%s120] sm:$0xff]
  %v125 = vld [vmem:[%s120 + $0x8] sm:$0xff]
  %v126 = vld [vmem:[%s120 + $0x10] sm:$0xff]
  %v127 = vld [vmem:[%s120 + $0x18] sm:$0xff]
  %v128 = vld [vmem:[%s120 + $0x20] sm:$0xff]
  %v129 = vld [vmem:[%s120 + $0x28] sm:$0xff]
  %v130 = vld [vmem:[%s120 + $0x30] sm:$0xff]
  %v131 = vld [vmem:[%s120 + $0x38] sm:$0xff]
  %v133 = vsel %vm26, %v121, 0
  %v136 = vsel %vm26, %v122, 0
  %v139 = vsel %vm26, %v123, 0
  %141 = vmatprep.subr.mxu0 0.0
  %142 = vmatpush1.msra.mxu0 %v11
  %143 = vmatprep.subr.mxu0 0.0
  %144 = vmatpush1.msra.mxu0 %v12
  %145 = vmatprep.subr.mxu0 0.0
  %146 = vmatpush1.msra.mxu0 %v13
  %147 = vmatprep.subr.mxu0 0.0
  %148 = vmatpush1.msra.mxu0 %v38
  %149 = vmatprep.subr.mxu0 0.0
  %150 = vmatpush1.msra.mxu0 0.0
  %151 = vmatprep.subr.mxu0 0.0
  %152 = vmatpush1.msra.mxu0 0.0
  %153 = vmatprep.subr.mxu0 0.0
  %154 = vmatpush1.msra.mxu0 0.0
  %155 = vmatprep.subr.mxu0 0.0
  %156 = vmatpush1.msra.mxu0 0.0
  %157 = vmatprep.subr.mxu0 0.0
  %158 = vmatpush1.msra.mxu0 0.0
  %159 = vmatprep.subr.mxu0 0.0
  %160 = vmatpush1.msra.mxu0 0.0
  %161 = vmatprep.subr.mxu0 0.0
  %162 = vmatpush1.msra.mxu0 0.0
  %163 = vmatprep.subr.mxu0 0.0
  %164 = vmatpush1.msra.mxu0 0.0
  %165 = vmatprep.subr.mxu0 0.0
  %166 = vmatpush1.msra.mxu0 0.0
  %167 = vmatprep.subr.mxu0 0.0
  %168 = vmatpush1.msra.mxu0 0.0
  %169 = vmatprep.subr.mxu0 0.0
  %170 = vmatpush1.msra.mxu0 0.0
  %171 = vmatprep.subr.mxu0 0.0
  %172 = vmatpush1.msra.mxu0 0.0
  %173 = vmatprep.subr.mxu0 0.0
  %174 = vmatpush1.msra.mxu0 0.0
  %175 = vmatprep.subr.mxu0 0.0
  %176 = vmatpush1.msra.mxu0 0.0
  %177 = vmatprep.subr.mxu0 0.0
  %178 = vmatpush1.msra.mxu0 0.0
  %179 = vmatprep.subr.mxu0 0.0
  %180 = vmatpush1.msra.mxu0 0.0
  %181 = vmatprep.subr.mxu0 0.0
  %182 = vmatpush1.msra.mxu0 0.0
  %183 = vmatprep.subr.mxu0 0.0
  %184 = vmatpush1.msra.mxu0 0.0
  %185 = vmatprep.subr.mxu0 0.0
  %186 = vmatpush1.msra.mxu0 0.0
  %187 = vmatprep.subr.mxu0 0.0
  %188 = vmatpush1.msra.mxu0 0.0
  %189 = vmatprep.subr.mxu0 0.0
  %190 = vmatpush1.msra.mxu0 0.0
  %191 = vmatprep.subr.mxu0 0.0
  %192 = vmatpush1.msra.mxu0 0.0
  %193 = vmatprep.subr.mxu0 0.0
  %194 = vmatpush1.msra.mxu0 0.0
  %195 = vmatprep.subr.mxu0 0.0
  %196 = vmatpush1.msra.mxu0 0.0
  %197 = vmatprep.subr.mxu0 0.0
  %198 = vmatpush1.msra.mxu0 0.0
  %199 = vmatprep.subr.mxu0 0.0
  %200 = vmatpush1.msra.mxu0 0.0
  %201 = vmatprep.subr.mxu0 0.0
  %202 = vmatpush1.msra.mxu0 0.0
  %203 = vmatprep.subr.mxu0 0.0
  %204 = vmatpush1.msra.mxu0 0.0
  %205 = vmatprep.mubr.f32.mxu0 0.0
  %206 = vmatmul.mubr.f32.gmra.mrb[0].mxu0 %v133
  %v207 = vpop.f32.mrb[0].mxu0
  %v208 = vadd.f32 0.0, %v207
  %v209 = vpop.f32.mrb[0].mxu0
  %210 = vmatprep.mubr.f32.mxu0 0.0
  %211 = vmatmul.mubr.f32.gmra.mrb[0].mxu0 %v136
  %v212 = vpop.f32.mrb[0].mxu0
  %v213 = vadd.f32 0.0, %v212
  %v214 = vpop.f32.mrb[0].mxu0
  %215 = vmatprep.mubr.f32.mxu0 0.0
  %216 = vmatmul.mubr.f32.gmra.mrb[0].mxu0 %v139
  %v217 = vpop.f32.mrb[0].mxu0
  %v218 = vadd.f32 0.0, %v217
  %v219 = vpop.f32.mrb[0].mxu0
  %220 = vdwg.mxu0
  %vm221 = vcmask 523264
  %v223 = vsel %vm221, %v208, 0
  %v226 = vsel %vm221, %v213, 0
  %v229 = vsel %vm221, %v218, 0
  %231 = vmatprep.subr.mxu0 0.0
  %232 = vmatpush1.msra.mxu0 %v124
  %233 = vmatprep.subr.mxu0 0.0
  %234 = vmatpush1.msra.mxu0 %v125
  %235 = vmatprep.subr.mxu0 0.0
  %236 = vmatpush1.msra.mxu0 %v126
  %237 = vmatprep.subr.mxu0 0.0
  %238 = vmatpush1.msra.mxu0 %v127
  %239 = vmatprep.subr.mxu0 0.0
  %240 = vmatpush1.msra.mxu0 %v128
  %241 = vmatprep.subr.mxu0 0.0
  %242 = vmatpush1.msra.mxu0 %v129
  %243 = vmatprep.subr.mxu0 0.0
  %244 = vmatpush1.msra.mxu0 %v130
  %245 = vmatprep.subr.mxu0 0.0
  %246 = vmatpush1.msra.mxu0 %v131
  %247 = vmatprep.subr.mxu0 0.0
  %248 = vmatpush1.msra.mxu0 0.0
  %249 = vmatprep.subr.mxu0 0.0
  %250 = vmatpush1.msra.mxu0 0.0
  %251 = vmatprep.subr.mxu0 0.0
  %252 = vmatpush1.msra.mxu0 0.0
  %253 = vmatprep.subr.mxu0 0.0
  %254 = vmatpush1.msra.mxu0 0.0
  %255 = vmatprep.subr.mxu0 0.0
  %256 = vmatpush1.msra.mxu0 0.0
  %257 = vmatprep.subr.mxu0 0.0
  %258 = vmatpush1.msra.mxu0 0.0
  %259 = vmatprep.subr.mxu0 0.0
  %260 = vmatpush1.msra.mxu0 0.0
  %261 = vmatprep.subr.mxu0 0.0
  %262 = vmatpush1.msra.mxu0 0.0
  %263 = vmatprep.subr.mxu0 0.0
  %264 = vmatpush1.msra.mxu0 0.0
  %265 = vmatprep.subr.mxu0 0.0
  %266 = vmatpush1.msra.mxu0 0.0
  %267 = vmatprep.subr.mxu0 0.0
  %268 = vmatpush1.msra.mxu0 0.0
  %269 = vmatprep.subr.mxu0 0.0
  %270 = vmatpush1.msra.mxu0 0.0
  %271 = vmatprep.subr.mxu0 0.0
  %272 = vmatpush1.msra.mxu0 0.0
  %273 = vmatprep.subr.mxu0 0.0
  %274 = vmatpush1.msra.mxu0 0.0
  %275 = vmatprep.subr.mxu0 0.0
  %276 = vmatpush1.msra.mxu0 0.0
  %277 = vmatprep.subr.mxu0 0.0
  %278 = vmatpush1.msra.mxu0 0.0
  %279 = vmatprep.subr.mxu0 0.0
  %280 = vmatpush1.msra.mxu0 0.0
  %281 = vmatprep.subr.mxu0 0.0
  %282 = vmatpush1.msra.mxu0 0.0
  %283 = vmatprep.subr.mxu0 0.0
  %284 = vmatpush1.msra.mxu0 0.0
  %285 = vmatprep.subr.mxu0 0.0
  %286 = vmatpush1.msra.mxu0 0.0
  %287 = vmatprep.subr.mxu0 0.0
  %288 = vmatpush1.msra.mxu0 0.0
  %289 = vmatprep.subr.mxu0 0.0
  %290 = vmatpush1.msra.mxu0 0.0
  %291 = vmatprep.subr.mxu0 0.0
  %292 = vmatpush1.msra.mxu0 0.0
  %293 = vmatprep.subr.mxu0 0.0
  %294 = vmatpush1.msra.mxu0 0.0
  %295 = vmatprep.mubr.f32.mxu0 0.0
  %296 = vmatmul.mubr.f32.gmra.mrb[0].mxu0 %v223
  %v297 = vpop.f32.mrb[0].mxu0
  %v298 = vadd.f32 0.0, %v297
  %v299 = vpop.f32.mrb[0].mxu0
  %300 = vmatprep.mubr.f32.mxu0 0.0
  %301 = vmatmul.mubr.f32.gmra.mrb[0].mxu0 %v226
  %v302 = vpop.f32.mrb[0].mxu0
  %v303 = vadd.f32 0.0, %v302
  %v304 = vpop.f32.mrb[0].mxu0
  %305 = vmatprep.mubr.f32.mxu0 0.0
  %306 = vmatmul.mubr.f32.gmra.mrb[0].mxu0 %v229
  %v307 = vpop.f32.mrb[0].mxu0
  %v308 = vadd.f32 0.0, %v307
  %v309 = vpop.f32.mrb[0].mxu0
  %310 = vdwg.mxu0
  %v312 = vsel %vm221, %v107, 0
  %v315 = vsel %vm221, %v112, 0
  %v318 = vsel %vm221, %v117, 0
  %320 = vmatprep.subr.mxu0 0.0
  %321 = vmatpush1.msra.mxu0 %v18
  %322 = vmatprep.subr.mxu0 0.0
  %323 = vmatpush1.msra.mxu0 %v19
  %324 = vmatprep.subr.mxu0 0.0
  %325 = vmatpush1.msra.mxu0 %v20
  %326 = vmatprep.subr.mxu0 0.0
  %327 = vmatpush1.msra.mxu0 %v21
  %328 = vmatprep.subr.mxu0 0.0
  %329 = vmatpush1.msra.mxu0 %v22
  %330 = vmatprep.subr.mxu0 0.0
  %331 = vmatpush1.msra.mxu0 %v23
  %332 = vmatprep.subr.mxu0 0.0
  %333 = vmatpush1.msra.mxu0 %v24
  %334 = vmatprep.subr.mxu0 0.0
  %335 = vmatpush1.msra.mxu0 %v25
  %336 = vmatprep.subr.mxu0 0.0
  %337 = vmatpush1.msra.mxu0 0.0
  %338 = vmatprep.subr.mxu0 0.0
  %339 = vmatpush1.msra.mxu0 0.0
  %340 = vmatprep.subr.mxu0 0.0
  %341 = vmatpush1.msra.mxu0 0.0
  %342 = vmatprep.subr.mxu0 0.0
  %343 = vmatpush1.msra.mxu0 0.0
  %344 = vmatprep.subr.mxu0 0.0
  %345 = vmatpush1.msra.mxu0 0.0
  %346 = vmatprep.subr.mxu0 0.0
  %347 = vmatpush1.msra.mxu0 0.0
  %348 = vmatprep.subr.mxu0 0.0
  %349 = vmatpush1.msra.mxu0 0.0
  %350 = vmatprep.subr.mxu0 0.0
  %351 = vmatpush1.msra.mxu0 0.0
  %352 = vmatprep.subr.mxu0 0.0
  %353 = vmatpush1.msra.mxu0 0.0
  %354 = vmatprep.subr.mxu0 0.0
  %355 = vmatpush1.msra.mxu0 0.0
  %356 = vmatprep.subr.mxu0 0.0
  %357 = vmatpush1.msra.mxu0 0.0
  %358 = vmatprep.subr.mxu0 0.0
  %359 = vmatpush1.msra.mxu0 0.0
  %360 = vmatprep.subr.mxu0 0.0
  %361 = vmatpush1.msra.mxu0 0.0
  %362 = vmatprep.subr.mxu0 0.0
  %363 = vmatpush1.msra.mxu0 0.0
  %364 = vmatprep.subr.mxu0 0.0
  %365 = vmatpush1.msra.mxu0 0.0
  %366 = vmatprep.subr.mxu0 0.0
  %367 = vmatpush1.msra.mxu0 0.0
  %368 = vmatprep.subr.mxu0 0.0
  %369 = vmatpush1.msra.mxu0 0.0
  %370 = vmatprep.subr.mxu0 0.0
  %371 = vmatpush1.msra.mxu0 0.0
  %372 = vmatprep.subr.mxu0 0.0
  %373 = vmatpush1.msra.mxu0 0.0
  %374 = vmatprep.subr.mxu0 0.0
  %375 = vmatpush1.msra.mxu0 0.0
  %376 = vmatprep.subr.mxu0 0.0
  %377 = vmatpush1.msra.mxu0 0.0
  %378 = vmatprep.subr.mxu0 0.0
  %379 = vmatpush1.msra.mxu0 0.0
  %380 = vmatprep.subr.mxu0 0.0
  %381 = vmatpush1.msra.mxu0 0.0
  %382 = vmatprep.subr.mxu0 0.0
  %383 = vmatpush1.msra.mxu0 0.0
  %384 = vmatprep.mubr.f32.mxu0 0.0
  %385 = vmatmul.mubr.f32.gmra.mrb[0].mxu0 %v312
  %v386 = vpop.f32.mrb[0].mxu0
  %v387 = vadd.f32 %v298, %v386
  %v388 = vpop.f32.mrb[0].mxu0
  %389 = vmatprep.mubr.f32.mxu0 0.0
  %390 = vmatmul.mubr.f32.gmra.mrb[0].mxu0 %v315
  %v391 = vpop.f32.mrb[0].mxu0
  %v392 = vadd.f32 %v303, %v391
  %v393 = vpop.f32.mrb[0].mxu0
  %394 = vmatprep.mubr.f32.mxu0 0.0
  %395 = vmatmul.mubr.f32.gmra.mrb[0].mxu0 %v318
  %v396 = vpop.f32.mrb[0].mxu0
  %v397 = vadd.f32 %v308, %v396
  %v398 = vpop.f32.mrb[0].mxu0
  %399 = vdwg.mxu0
  %s400 = scalar_lea.vmem %s1, 304
  %v401 = vld [vmem:[%s400 + $0x40] sm:$0xff]
  %v402 = vld [vmem:[%s400 + $0x48] sm:$0xff]
  %v403 = vld [vmem:[%s400 + $0x50] sm:$0xf]
  %v404 = vld [vmem:[%s400] sm:$0xff]
  %v405 = vld [vmem:[%s400 + $0x8] sm:$0xff]
  %v406 = vld [vmem:[%s400 + $0x10] sm:$0xff]
  %v407 = vld [vmem:[%s400 + $0x18] sm:$0xff]
  %v408 = vld [vmem:[%s400 + $0x20] sm:$0xff]
  %v409 = vld [vmem:[%s400 + $0x28] sm:$0xff]
  %v410 = vld [vmem:[%s400 + $0x30] sm:$0xff]
  %v411 = vld [vmem:[%s400 + $0x38] sm:$0xff]
  %v413 = vsel %vm26, %v401, 0
  %v416 = vsel %vm26, %v402, 0
  %v419 = vsel %vm26, %v403, 0
  %421 = vmatprep.subr.mxu0 0.0
  %422 = vmatpush1.msra.mxu0 %v11
  %423 = vmatprep.subr.mxu0 0.0
  %424 = vmatpush1.msra.mxu0 %v12
  %425 = vmatprep.subr.mxu0 0.0
  %426 = vmatpush1.msra.mxu0 %v13
  %427 = vmatprep.subr.mxu0 0.0
  %428 = vmatpush1.msra.mxu0 %v38
  %429 = vmatprep.subr.mxu0 0.0
  %430 = vmatpush1.msra.mxu0 0.0
  %431 = vmatprep.subr.mxu0 0.0
  %432 = vmatpush1.msra.mxu0 0.0
  %433 = vmatprep.subr.mxu0 0.0
  %434 = vmatpush1.msra.mxu0 0.0
  %435 = vmatprep.subr.mxu0 0.0
  %436 = vmatpush1.msra.mxu0 0.0
  %437 = vmatprep.subr.mxu0 0.0
  %438 = vmatpush1.msra.mxu0 0.0
  %439 = vmatprep.subr.mxu0 0.0
  %440 = vmatpush1.msra.mxu0 0.0
  %441 = vmatprep.subr.mxu0 0.0
  %442 = vmatpush1.msra.mxu0 0.0
  %443 = vmatprep.subr.mxu0 0.0
  %444 = vmatpush1.msra.mxu0 0.0
  %445 = vmatprep.subr.mxu0 0.0
  %446 = vmatpush1.msra.mxu0 0.0
  %447 = vmatprep.subr.mxu0 0.0
  %448 = vmatpush1.msra.mxu0 0.0
  %449 = vmatprep.subr.mxu0 0.0
  %450 = vmatpush1.msra.mxu0 0.0
  %451 = vmatprep.subr.mxu0 0.0
  %452 = vmatpush1.msra.mxu0 0.0
  %453 = vmatprep.subr.mxu0 0.0
  %454 = vmatpush1.msra.mxu0 0.0
  %455 = vmatprep.subr.mxu0 0.0
  %456 = vmatpush1.msra.mxu0 0.0
  %457 = vmatprep.subr.mxu0 0.0
  %458 = vmatpush1.msra.mxu0 0.0
  %459 = vmatprep.subr.mxu0 0.0
  %460 = vmatpush1.msra.mxu0 0.0
  %461 = vmatprep.subr.mxu0 0.0
  %462 = vmatpush1.msra.mxu0 0.0
  %463 = vmatprep.subr.mxu0 0.0
  %464 = vmatpush1.msra.mxu0 0.0
  %465 = vmatprep.subr.mxu0 0.0
  %466 = vmatpush1.msra.mxu0 0.0
  %467 = vmatprep.subr.mxu0 0.0
  %468 = vmatpush1.msra.mxu0 0.0
  %469 = vmatprep.subr.mxu0 0.0
  %470 = vmatpush1.msra.mxu0 0.0
  %471 = vmatprep.subr.mxu0 0.0
  %472 = vmatpush1.msra.mxu0 0.0
  %473 = vmatprep.subr.mxu0 0.0
  %474 = vmatpush1.msra.mxu0 0.0
  %475 = vmatprep.subr.mxu0 0.0
  %476 = vmatpush1.msra.mxu0 0.0
  %477 = vmatprep.subr.mxu0 0.0
  %478 = vmatpush1.msra.mxu0 0.0
  %479 = vmatprep.subr.mxu0 0.0
  %480 = vmatpush1.msra.mxu0 0.0
  %481 = vmatprep.subr.mxu0 0.0
  %482 = vmatpush1.msra.mxu0 0.0
  %483 = vmatprep.subr.mxu0 0.0
  %484 = vmatpush1.msra.mxu0 0.0
  %485 = vmatprep.mubr.f32.mxu0 0.0
  %486 = vmatmul.mubr.f32.gmra.mrb[0].mxu0 %v413
  %v487 = vpop.f32.mrb[0].mxu0
  %v488 = vadd.f32 0.0, %v487
  %v489 = vpop.f32.mrb[0].mxu0
  %490 = vmatprep.mubr.f32.mxu0 0.0
  %491 = vmatmul.mubr.f32.gmra.mrb[0].mxu0 %v416
  %v492 = vpop.f32.mrb[0].mxu0
  %v493 = vadd.f32 0.0, %v492
  %v494 = vpop.f32.mrb[0].mxu0
  %495 = vmatprep.mubr.f32.mxu0 0.0
  %496 = vmatmul.mubr.f32.gmra.mrb[0].mxu0 %v419
  %v497 = vpop.f32.mrb[0].mxu0
  %v498 = vadd.f32 0.0, %v497
  %v499 = vpop.f32.mrb[0].mxu0
  %500 = vdwg.mxu0
  %v502 = vsel %vm221, %v488, 0
  %v505 = vsel %vm221, %v493, 0
  %v508 = vsel %vm221, %v498, 0
  %510 = vmatprep.subr.mxu0 0.0
  %511 = vmatpush1.msra.mxu0 %v404
  %512 = vmatprep.subr.mxu0 0.0
  %513 = vmatpush1.msra.mxu0 %v405
  %514 = vmatprep.subr.mxu0 0.0
  %515 = vmatpush1.msra.mxu0 %v406
  %516 = vmatprep.subr.mxu0 0.0
  %517 = vmatpush1.msra.mxu0 %v407
  %518 = vmatprep.subr.mxu0 0.0
  %519 = vmatpush1.msra.mxu0 %v408
  %520 = vmatprep.subr.mxu0 0.0
  %521 = vmatpush1.msra.mxu0 %v409
  %522 = vmatprep.subr.mxu0 0.0
  %523 = vmatpush1.msra.mxu0 %v410
  %524 = vmatprep.subr.mxu0 0.0
  %525 = vmatpush1.msra.mxu0 %v411
  %526 = vmatprep.subr.mxu0 0.0
  %527 = vmatpush1.msra.mxu0 0.0
  %528 = vmatprep.subr.mxu0 0.0
  %529 = vmatpush1.msra.mxu0 0.0
  %530 = vmatprep.subr.mxu0 0.0
  %531 = vmatpush1.msra.mxu0 0.0
  %532 = vmatprep.subr.mxu0 0.0
  %533 = vmatpush1.msra.mxu0 0.0
  %534 = vmatprep.subr.mxu0 0.0
  %535 = vmatpush1.msra.mxu0 0.0
  %536 = vmatprep.subr.mxu0 0.0
  %537 = vmatpush1.msra.mxu0 0.0
  %538 = vmatprep.subr.mxu0 0.0
  %539 = vmatpush1.msra.mxu0 0.0
  %540 = vmatprep.subr.mxu0 0.0
  %541 = vmatpush1.msra.mxu0 0.0
  %542 = vmatprep.subr.mxu0 0.0
  %543 = vmatpush1.msra.mxu0 0.0
  %544 = vmatprep.subr.mxu0 0.0
  %545 = vmatpush1.msra.mxu0 0.0
  %546 = vmatprep.subr.mxu0 0.0
  %547 = vmatpush1.msra.mxu0 0.0
  %548 = vmatprep.subr.mxu0 0.0
  %549 = vmatpush1.msra.mxu0 0.0
  %550 = vmatprep.subr.mxu0 0.0
  %551 = vmatpush1.msra.mxu0 0.0
  %552 = vmatprep.subr.mxu0 0.0
  %553 = vmatpush1.msra.mxu0 0.0
  %554 = vmatprep.subr.mxu0 0.0
  %555 = vmatpush1.msra.mxu0 0.0
  %556 = vmatprep.subr.mxu0 0.0
  %557 = vmatpush1.msra.mxu0 0.0
  %558 = vmatprep.subr.mxu0 0.0
  %559 = vmatpush1.msra.mxu0 0.0
  %560 = vmatprep.subr.mxu0 0.0
  %561 = vmatpush1.msra.mxu0 0.0
  %562 = vmatprep.subr.mxu0 0.0
  %563 = vmatpush1.msra.mxu0 0.0
  %564 = vmatprep.subr.mxu0 0.0
  %565 = vmatpush1.msra.mxu0 0.0
  %566 = vmatprep.subr.mxu0 0.0
  %567 = vmatpush1.msra.mxu0 0.0
  %568 = vmatprep.subr.mxu0 0.0
  %569 = vmatpush1.msra.mxu0 0.0
  %570 = vmatprep.subr.mxu0 0.0
  %571 = vmatpush1.msra.mxu0 0.0
  %572 = vmatprep.subr.mxu0 0.0
  %573 = vmatpush1.msra.mxu0 0.0
  %574 = vmatprep.mubr.f32.mxu0 0.0
  %575 = vmatmul.mubr.f32.gmra.mrb[0].mxu0 %v502
  %v576 = vpop.f32.mrb[0].mxu0
  %v577 = vadd.f32 0.0, %v576
  %v578 = vpop.f32.mrb[0].mxu0
  %579 = vmatprep.mubr.f32.mxu0 0.0
  %580 = vmatmul.mubr.f32.gmra.mrb[0].mxu0 %v505
  %v581 = vpop.f32.mrb[0].mxu0
  %v582 = vadd.f32 0.0, %v581
  %v583 = vpop.f32.mrb[0].mxu0
  %584 = vmatprep.mubr.f32.mxu0 0.0
  %585 = vmatmul.mubr.f32.gmra.mrb[0].mxu0 %v508
  %v586 = vpop.f32.mrb[0].mxu0
  %v587 = vadd.f32 0.0, %v586
  %v588 = vpop.f32.mrb[0].mxu0
  %589 = vdwg.mxu0
  %v590 = vadd.f32 %v387, %v577
  %v591 = vadd.f32 %v392, %v582
  %v592 = vadd.f32 %v397, %v587
  %v593 = vld [vmem:[%s1 + $0x58] sm:$0xff]
  %v594 = vld [vmem:[%s1 + $0x60] sm:$0xff]
  %v595 = vld [vmem:[%s1 + $0x68] sm:$0xff]
  %v596 = vld [vmem:[%s1 + $0x70] sm:$0x7f]
  %vm597 = vcmask 252928
  %v599 = vsel %vm597, %v590, 0
  %v602 = vsel %vm597, %v591, 0
  %v605 = vsel %vm597, %v592, 0
  %vm607 = vcmask 1046528
  %v609 = vsel %vm607, %v596, 0
  %611 = vmatprep.subr.mxu0 0.0
  %612 = vmatpush1.msra.mxu0 %v593
  %613 = vmatprep.subr.mxu0 0.0
  %614 = vmatpush1.msra.mxu0 %v594
  %615 = vmatprep.subr.mxu0 0.0
  %616 = vmatpush1.msra.mxu0 %v595
  %617 = vmatprep.subr.mxu0 0.0
  %618 = vmatpush1.msra.mxu0 %v609
  %619 = vmatprep.subr.mxu0 0.0
  %620 = vmatpush1.msra.mxu0 0.0
  %621 = vmatprep.subr.mxu0 0.0
  %622 = vmatpush1.msra.mxu0 0.0
  %623 = vmatprep.subr.mxu0 0.0
  %624 = vmatpush1.msra.mxu0 0.0
  %625 = vmatprep.subr.mxu0 0.0
  %626 = vmatpush1.msra.mxu0 0.0
  %627 = vmatprep.subr.mxu0 0.0
  %628 = vmatpush1.msra.mxu0 0.0
  %629 = vmatprep.subr.mxu0 0.0
  %630 = vmatpush1.msra.mxu0 0.0
  %631 = vmatprep.subr.mxu0 0.0
  %632 = vmatpush1.msra.mxu0 0.0
  %633 = vmatprep.subr.mxu0 0.0
  %634 = vmatpush1.msra.mxu0 0.0
  %635 = vmatprep.subr.mxu0 0.0
  %636 = vmatpush1.msra.mxu0 0.0
  %637 = vmatprep.subr.mxu0 0.0
  %638 = vmatpush1.msra.mxu0 0.0
  %639 = vmatprep.subr.mxu0 0.0
  %640 = vmatpush1.msra.mxu0 0.0
  %641 = vmatprep.subr.mxu0 0.0
  %642 = vmatpush1.msra.mxu0 0.0
  %643 = vmatprep.subr.mxu0 0.0
  %644 = vmatpush1.msra.mxu0 0.0
  %645 = vmatprep.subr.mxu0 0.0
  %646 = vmatpush1.msra.mxu0 0.0
  %647 = vmatprep.subr.mxu0 0.0
  %648 = vmatpush1.msra.mxu0 0.0
  %649 = vmatprep.subr.mxu0 0.0
  %650 = vmatpush1.msra.mxu0 0.0
  %651 = vmatprep.subr.mxu0 0.0
  %652 = vmatpush1.msra.mxu0 0.0
  %653 = vmatprep.subr.mxu0 0.0
  %654 = vmatpush1.msra.mxu0 0.0
  %655 = vmatprep.subr.mxu0 0.0
  %656 = vmatpush1.msra.mxu0 0.0
  %657 = vmatprep.subr.mxu0 0.0
  %658 = vmatpush1.msra.mxu0 0.0
  %659 = vmatprep.subr.mxu0 0.0
  %660 = vmatpush1.msra.mxu0 0.0
  %661 = vmatprep.subr.mxu0 0.0
  %662 = vmatpush1.msra.mxu0 0.0
  %663 = vmatprep.subr.mxu0 0.0
  %664 = vmatpush1.msra.mxu0 0.0
  %665 = vmatprep.subr.mxu0 0.0
  %666 = vmatpush1.msra.mxu0 0.0
  %667 = vmatprep.subr.mxu0 0.0
  %668 = vmatpush1.msra.mxu0 0.0
  %669 = vmatprep.subr.mxu0 0.0
  %670 = vmatpush1.msra.mxu0 0.0
  %671 = vmatprep.subr.mxu0 0.0
  %672 = vmatpush1.msra.mxu0 0.0
  %673 = vmatprep.subr.mxu0 0.0
  %674 = vmatpush1.msra.mxu0 0.0
  %675 = vmatprep.mubr.f32.mxu0 0.0
  %676 = vmatmul.mubr.f32.gmra.mrb[0].mxu0 %v599
  %v677 = vpop.f32.mrb[0].mxu0
  %v678 = vadd.f32 0.0, %v677
  %v679 = vpop.f32.mrb[0].mxu0
  %680 = vmatprep.mubr.f32.mxu0 0.0
  %681 = vmatmul.mubr.f32.gmra.mrb[0].mxu0 %v602
  %v682 = vpop.f32.mrb[0].mxu0
  %v683 = vadd.f32 0.0, %v682
  %v684 = vpop.f32.mrb[0].mxu0
  %685 = vmatprep.mubr.f32.mxu0 0.0
  %686 = vmatmul.mubr.f32.gmra.mrb[0].mxu0 %v605
  %v687 = vpop.f32.mrb[0].mxu0
  %v688 = vadd.f32 0.0, %v687
  %v689 = vpop.f32.mrb[0].mxu0
  %690 = vdwg.mxu0
  %v691 = vld [vmem:[%s120 + $0x58] sm:$0xff]
  %v692 = vld [vmem:[%s120 + $0x60] sm:$0xff]
  %v693 = vld [vmem:[%s120 + $0x68] sm:$0xff]
  %v694 = vld [vmem:[%s120 + $0x70] sm:$0x7f]
  %v696 = vsel %vm607, %v694, 0
  %698 = vmatprep.subr.mxu0 0.0
  %699 = vmatpush1.msra.mxu0 %v691
  %700 = vmatprep.subr.mxu0 0.0
  %701 = vmatpush1.msra.mxu0 %v692
  %702 = vmatprep.subr.mxu0 0.0
  %703 = vmatpush1.msra.mxu0 %v693
  %704 = vmatprep.subr.mxu0 0.0
  %705 = vmatpush1.msra.mxu0 %v696
  %706 = vmatprep.subr.mxu0 0.0
  %707 = vmatpush1.msra.mxu0 0.0
  %708 = vmatprep.subr.mxu0 0.0
  %709 = vmatpush1.msra.mxu0 0.0
  %710 = vmatprep.subr.mxu0 0.0
  %711 = vmatpush1.msra.mxu0 0.0
  %712 = vmatprep.subr.mxu0 0.0
  %713 = vmatpush1.msra.mxu0 0.0
  %714 = vmatprep.subr.mxu0 0.0
  %715 = vmatpush1.msra.mxu0 0.0
  %716 = vmatprep.subr.mxu0 0.0
  %717 = vmatpush1.msra.mxu0 0.0
  %718 = vmatprep.subr.mxu0 0.0
  %719 = vmatpush1.msra.mxu0 0.0
  %720 = vmatprep.subr.mxu0 0.0
  %721 = vmatpush1.msra.mxu0 0.0
  %722 = vmatprep.subr.mxu0 0.0
  %723 = vmatpush1.msra.mxu0 0.0
  %724 = vmatprep.subr.mxu0 0.0
  %725 = vmatpush1.msra.mxu0 0.0
  %726 = vmatprep.subr.mxu0 0.0
  %727 = vmatpush1.msra.mxu0 0.0
  %728 = vmatprep.subr.mxu0 0.0
  %729 = vmatpush1.msra.mxu0 0.0
  %730 = vmatprep.subr.mxu0 0.0
  %731 = vmatpush1.msra.mxu0 0.0
  %732 = vmatprep.subr.mxu0 0.0
  %733 = vmatpush1.msra.mxu0 0.0
  %734 = vmatprep.subr.mxu0 0.0
  %735 = vmatpush1.msra.mxu0 0.0
  %736 = vmatprep.subr.mxu0 0.0
  %737 = vmatpush1.msra.mxu0 0.0
  %738 = vmatprep.subr.mxu0 0.0
  %739 = vmatpush1.msra.mxu0 0.0
  %740 = vmatprep.subr.mxu0 0.0
  %741 = vmatpush1.msra.mxu0 0.0
  %742 = vmatprep.subr.mxu0 0.0
  %743 = vmatpush1.msra.mxu0 0.0
  %744 = vmatprep.subr.mxu0 0.0
  %745 = vmatpush1.msra.mxu0 0.0
  %746 = vmatprep.subr.mxu0 0.0
  %747 = vmatpush1.msra.mxu0 0.0
  %748 = vmatprep.subr.mxu0 0.0
  %749 = vmatpush1.msra.mxu0 0.0
  %750 = vmatprep.subr.mxu0 0.0
  %751 = vmatpush1.msra.mxu0 0.0
  %752 = vmatprep.subr.mxu0 0.0
  %753 = vmatpush1.msra.mxu0 0.0
  %754 = vmatprep.subr.mxu0 0.0
  %755 = vmatpush1.msra.mxu0 0.0
  %756 = vmatprep.subr.mxu0 0.0
  %757 = vmatpush1.msra.mxu0 0.0
  %758 = vmatprep.subr.mxu0 0.0
  %759 = vmatpush1.msra.mxu0 0.0
  %760 = vmatprep.subr.mxu0 0.0
  %761 = vmatpush1.msra.mxu0 0.0
  %762 = vmatprep.mubr.f32.mxu0 0.0
  %763 = vmatmul.mubr.f32.gmra.mrb[0].mxu0 %v599
  %v764 = vpop.f32.mrb[0].mxu0
  %v765 = vadd.f32 0.0, %v764
  %v766 = vpop.f32.mrb[0].mxu0
  %767 = vmatprep.mubr.f32.mxu0 0.0
  %768 = vmatmul.mubr.f32.gmra.mrb[0].mxu0 %v602
  %v769 = vpop.f32.mrb[0].mxu0
  %v770 = vadd.f32 0.0, %v769
  %v771 = vpop.f32.mrb[0].mxu0
  %772 = vmatprep.mubr.f32.mxu0 0.0
  %773 = vmatmul.mubr.f32.gmra.mrb[0].mxu0 %v605
  %v774 = vpop.f32.mrb[0].mxu0
  %v775 = vadd.f32 0.0, %v774
  %v776 = vpop.f32.mrb[0].mxu0
  %777 = vdwg.mxu0
  %v778 = vmax.f32 %v678, %v765
  %v779 = vmax.f32 %v683, %v770
  %v780 = vmax.f32 %v688, %v775
  %v781 = vld [vmem:[%s400 + $0x58] sm:$0xff]
  %v782 = vld [vmem:[%s400 + $0x60] sm:$0xff]
  %v783 = vld [vmem:[%s400 + $0x68] sm:$0xff]
  %v784 = vld [vmem:[%s400 + $0x70] sm:$0x7f]
  %v786 = vsel %vm607, %v784, 0
  %788 = vmatprep.subr.mxu0 0.0
  %789 = vmatpush1.msra.mxu0 %v781
  %790 = vmatprep.subr.mxu0 0.0
  %791 = vmatpush1.msra.mxu0 %v782
  %792 = vmatprep.subr.mxu0 0.0
  %793 = vmatpush1.msra.mxu0 %v783
  %794 = vmatprep.subr.mxu0 0.0
  %795 = vmatpush1.msra.mxu0 %v786
  %796 = vmatprep.subr.mxu0 0.0
  %797 = vmatpush1.msra.mxu0 0.0
  %798 = vmatprep.subr.mxu0 0.0
  %799 = vmatpush1.msra.mxu0 0.0
  %800 = vmatprep.subr.mxu0 0.0
  %801 = vmatpush1.msra.mxu0 0.0
  %802 = vmatprep.subr.mxu0 0.0
  %803 = vmatpush1.msra.mxu0 0.0
  %804 = vmatprep.subr.mxu0 0.0
  %805 = vmatpush1.msra.mxu0 0.0
  %806 = vmatprep.subr.mxu0 0.0
  %807 = vmatpush1.msra.mxu0 0.0
  %808 = vmatprep.subr.mxu0 0.0
  %809 = vmatpush1.msra.mxu0 0.0
  %810 = vmatprep.subr.mxu0 0.0
  %811 = vmatpush1.msra.mxu0 0.0
  %812 = vmatprep.subr.mxu0 0.0
  %813 = vmatpush1.msra.mxu0 0.0
  %814 = vmatprep.subr.mxu0 0.0
  %815 = vmatpush1.msra.mxu0 0.0
  %816 = vmatprep.subr.mxu0 0.0
  %817 = vmatpush1.msra.mxu0 0.0
  %818 = vmatprep.subr.mxu0 0.0
  %819 = vmatpush1.msra.mxu0 0.0
  %820 = vmatprep.subr.mxu0 0.0
  %821 = vmatpush1.msra.mxu0 0.0
  %822 = vmatprep.subr.mxu0 0.0
  %823 = vmatpush1.msra.mxu0 0.0
  %824 = vmatprep.subr.mxu0 0.0
  %825 = vmatpush1.msra.mxu0 0.0
  %826 = vmatprep.subr.mxu0 0.0
  %827 = vmatpush1.msra.mxu0 0.0
  %828 = vmatprep.subr.mxu0 0.0
  %829 = vmatpush1.msra.mxu0 0.0
  %830 = vmatprep.subr.mxu0 0.0
  %831 = vmatpush1.msra.mxu0 0.0
  %832 = vmatprep.subr.mxu0 0.0
  %833 = vmatpush1.msra.mxu0 0.0
  %834 = vmatprep.subr.mxu0 0.0
  %835 = vmatpush1.msra.mxu0 0.0
  %836 = vmatprep.subr.mxu0 0.0
  %837 = vmatpush1.msra.mxu0 0.0
  %838 = vmatprep.subr.mxu0 0.0
  %839 = vmatpush1.msra.mxu0 0.0
  %840 = vmatprep.subr.mxu0 0.0
  %841 = vmatpush1.msra.mxu0 0.0
  %842 = vmatprep.subr.mxu0 0.0
  %843 = vmatpush1.msra.mxu0 0.0
  %844 = vmatprep.subr.mxu0 0.0
  %845 = vmatpush1.msra.mxu0 0.0
  %846 = vmatprep.subr.mxu0 0.0
  %847 = vmatpush1.msra.mxu0 0.0
  %848 = vmatprep.subr.mxu0 0.0
  %849 = vmatpush1.msra.mxu0 0.0
  %850 = vmatprep.subr.mxu0 0.0
  %851 = vmatpush1.msra.mxu0 0.0
  %852 = vmatprep.mubr.f32.mxu0 0.0
  %853 = vmatmul.mubr.f32.gmra.mrb[0].mxu0 %v599
  %v854 = vpop.f32.mrb[0].mxu0
  %v855 = vadd.f32 0.0, %v854
  %v856 = vpop.f32.mrb[0].mxu0
  %857 = vmatprep.mubr.f32.mxu0 0.0
  %858 = vmatmul.mubr.f32.gmra.mrb[0].mxu0 %v602
  %v859 = vpop.f32.mrb[0].mxu0
  %v860 = vadd.f32 0.0, %v859
  %v861 = vpop.f32.mrb[0].mxu0
  %862 = vmatprep.mubr.f32.mxu0 0.0
  %863 = vmatmul.mubr.f32.gmra.mrb[0].mxu0 %v605
  %v864 = vpop.f32.mrb[0].mxu0
  %v865 = vadd.f32 0.0, %v864
  %v866 = vpop.f32.mrb[0].mxu0
  %867 = vdwg.mxu0
  %v868 = vmax.f32 %v778, %v855
  %v869 = vmax.f32 %v779, %v860
  %v870 = vmax.f32 %v780, %v865
  %v871 = vld [vmem:[%s1 + $0x78] sm:$0xff]
  %v872 = vld [vmem:[%s1 + $0x80] sm:$0xff]
  %v873 = vld [vmem:[%s1 + $0x88] sm:$0xf]
  %v874 = vld [vmem:[%s1 + $0x90] sm:$0x3]
  %v875 = vld [vmem:[%s1 + $0x92] sm:$0x1]
  %v876 = vmul.f32 %v868, %v871
  %v877 = vmul.f32 %v869, %v872
  %v878 = vmul.f32 %v870, %v873
  %vm879 = vcmask 162816
  %v881 = vsel %vm879, %v874, 0
  %v884 = vsel %vm36, %v878, 0
  %886 = vmatprep.subr.mxu0 0.0
  %887 = vmatpush1.msra.mxu0 %v876
  %888 = vmatprep.subr.mxu0 0.0
  %889 = vmatpush1.msra.mxu0 %v877
  %890 = vmatprep.subr.mxu0 0.0
  %891 = vmatpush1.msra.mxu0 %v884
  %892 = vmatprep.subr.mxu0 0.0
  %893 = vmatpush1.msra.mxu0 0.0
  %894 = vmatprep.subr.mxu0 0.0
  %895 = vmatpush1.msra.mxu0 0.0
  %896 = vmatprep.subr.mxu0 0.0
  %897 = vmatpush1.msra.mxu0 0.0
  %898 = vmatprep.subr.mxu0 0.0
  %899 = vmatpush1.msra.mxu0 0.0
  %900 = vmatprep.subr.mxu0 0.0
  %901 = vmatpush1.msra.mxu0 0.0
  %902 = vmatprep.subr.mxu0 0.0
  %903 = vmatpush1.msra.mxu0 0.0
  %904 = vmatprep.subr.mxu0 0.0
  %905 = vmatpush1.msra.mxu0 0.0
  %906 = vmatprep.subr.mxu0 0.0
  %907 = vmatpush1.msra.mxu0 0.0
  %908 = vmatprep.subr.mxu0 0.0
  %909 = vmatpush1.msra.mxu0 0.0
  %910 = vmatprep.subr.mxu0 0.0
  %911 = vmatpush1.msra.mxu0 0.0
  %912 = vmatprep.subr.mxu0 0.0
  %913 = vmatpush1.msra.mxu0 0.0
  %914 = vmatprep.subr.mxu0 0.0
  %915 = vmatpush1.msra.mxu0 0.0
  %916 = vmatprep.subr.mxu0 0.0
  %917 = vmatpush1.msra.mxu0 0.0
  %918 = vmatprep.subr.mxu0 0.0
  %919 = vmatpush1.msra.mxu0 0.0
  %920 = vmatprep.subr.mxu0 0.0
  %921 = vmatpush1.msra.mxu0 0.0
  %922 = vmatprep.subr.mxu0 0.0
  %923 = vmatpush1.msra.mxu0 0.0
  %924 = vmatprep.subr.mxu0 0.0
  %925 = vmatpush1.msra.mxu0 0.0
  %926 = vmatprep.subr.mxu0 0.0
  %927 = vmatpush1.msra.mxu0 0.0
  %928 = vmatprep.subr.mxu0 0.0
  %929 = vmatpush1.msra.mxu0 0.0
  %930 = vmatprep.subr.mxu0 0.0
  %931 = vmatpush1.msra.mxu0 0.0
  %932 = vmatprep.subr.mxu0 0.0
  %933 = vmatpush1.msra.mxu0 0.0
  %934 = vmatprep.subr.mxu0 0.0
  %935 = vmatpush1.msra.mxu0 0.0
  %936 = vmatprep.subr.mxu0 0.0
  %937 = vmatpush1.msra.mxu0 0.0
  %938 = vmatprep.subr.mxu0 0.0
  %939 = vmatpush1.msra.mxu0 0.0
  %940 = vmatprep.subr.mxu0 0.0
  %941 = vmatpush1.msra.mxu0 0.0
  %942 = vmatprep.subr.mxu0 0.0
  %943 = vmatpush1.msra.mxu0 0.0
  %944 = vmatprep.subr.mxu0 0.0
  %945 = vmatpush1.msra.mxu0 0.0
  %946 = vmatprep.subr.mxu0 0.0
  %947 = vmatpush1.msra.mxu0 0.0
  %948 = vmatprep.subr.mxu0 0.0
  %949 = vmatpush1.msra.mxu0 0.0
  %950 = vmatprep.mubr.f32.mxu0 0.0
  %951 = vmatmul.mubr.f32.gmra.mrb[0].mxu0 %v881
  %v952 = vpop.f32.mrb[0].mxu0
  %v953 = vadd.f32 0.0, %v952
  %v954 = vpop.f32.mrb[0].mxu0
  %955 = vdwg.mxu0
  %s957 = vtos %v875
  %v958 = vstv %s957
  %v961 = vsel %vm879, %v953, 0
  %v964 = vsel %vm36, 1.0, 0
  %966 = vmatprep.subr.mxu0 0.0
  %967 = vmatpush1.msra.mxu0 1.0
  %968 = vmatprep.subr.mxu0 0.0
  %969 = vmatpush1.msra.mxu0 1.0
  %970 = vmatprep.subr.mxu0 0.0
  %971 = vmatpush1.msra.mxu0 %v964
  %972 = vmatprep.subr.mxu0 0.0
  %973 = vmatpush1.msra.mxu0 0.0
  %974 = vmatprep.subr.mxu0 0.0
  %975 = vmatpush1.msra.mxu0 0.0
  %976 = vmatprep.subr.mxu0 0.0
  %977 = vmatpush1.msra.mxu0 0.0
  %978 = vmatprep.subr.mxu0 0.0
  %979 = vmatpush1.msra.mxu0 0.0
  %980 = vmatprep.subr.mxu0 0.0
  %981 = vmatpush1.msra.mxu0 0.0
  %982 = vmatprep.subr.mxu0 0.0
  %983 = vmatpush1.msra.mxu0 0.0
  %984 = vmatprep.subr.mxu0 0.0
  %985 = vmatpush1.msra.mxu0 0.0
  %986 = vmatprep.subr.mxu0 0.0
  %987 = vmatpush1.msra.mxu0 0.0
  %988 = vmatprep.subr.mxu0 0.0
  %989 = vmatpush1.msra.mxu0 0.0
  %990 = vmatprep.subr.mxu0 0.0
  %991 = vmatpush1.msra.mxu0 0.0
  %992 = vmatprep.subr.mxu0 0.0
  %993 = vmatpush1.msra.mxu0 0.0
  %994 = vmatprep.subr.mxu0 0.0
  %995 = vmatpush1.msra.mxu0 0.0
  %996 = vmatprep.subr.mxu0 0.0
  %997 = vmatpush1.msra.mxu0 0.0
  %998 = vmatprep.subr.mxu0 0.0
  %999 = vmatpush1.msra.mxu0 0.0
  %1000 = vmatprep.subr.mxu0 0.0
  %1001 = vmatpush1.msra.mxu0 0.0
  %1002 = vmatprep.subr.mxu0 0.0
  %1003 = vmatpush1.msra.mxu0 0.0
  %1004 = vmatprep.subr.mxu0 0.0
  %1005 = vmatpush1.msra.mxu0 0.0
  %1006 = vmatprep.subr.mxu0 0.0
  %1007 = vmatpush1.msra.mxu0 0.0
  %1008 = vmatprep.subr.mxu0 0.0
  %1009 = vmatpush1.msra.mxu0 0.0
  %1010 = vmatprep.subr.mxu0 0.0
  %1011 = vmatpush1.msra.mxu0 0.0
  %1012 = vmatprep.subr.mxu0 0.0
  %1013 = vmatpush1.msra.mxu0 0.0
  %1014 = vmatprep.subr.mxu0 0.0
  %1015 = vmatpush1.msra.mxu0 0.0
  %1016 = vmatprep.subr.mxu0 0.0
  %1017 = vmatpush1.msra.mxu0 0.0
  %1018 = vmatprep.subr.mxu0 0.0
  %1019 = vmatpush1.msra.mxu0 0.0
  %1020 = vmatprep.subr.mxu0 0.0
  %1021 = vmatpush1.msra.mxu0 0.0
  %1022 = vmatprep.subr.mxu0 0.0
  %1023 = vmatpush1.msra.mxu0 0.0
  %1024 = vmatprep.subr.mxu0 0.0
  %1025 = vmatpush1.msra.mxu0 0.0
  %1026 = vmatprep.subr.mxu0 0.0
  %1027 = vmatpush1.msra.mxu0 0.0
  %1028 = vmatprep.subr.mxu0 0.0
  %1029 = vmatpush1.msra.mxu0 0.0
  %1030 = vmatprep.mubr.f32.mxu0 0.0
  %1031 = vmatmul.mubr.f32.gmra.mrb[0].mxu0 %v961
  %v1032 = vpop.f32.mrb[0].mxu0
  %v1033 = vadd.f32 %v958, %v1032
  %v1034 = vpop.f32.mrb[0].mxu0
  %1035 = vdwg.mxu0
  %1036 = vst [vmem:[%s2] sm:$0x3] %v1033
  // Predicated region
  $region10: #{cnn_forward.1} parent=0 // pred_check
    _
  $region11: #{cnn_forward.1} parent=0 // pred_check_branch
    %1038 = sbr.rel (0) target = $region13
  $region12: #{cnn_forward.1} parent=0 // pred_region
    _
  $region13: #{cnn_forward.1} parent=0 // pred_fallthru
    _
  // Predicated region
  $region14: #{cnn_forward.1} parent=0 // pred_check
    _
  $region15: #{cnn_forward.1} parent=0 // pred_check_branch
    %1040 = sbr.rel (0) target = $region17
  $region16: #{cnn_forward.1} parent=0 // pred_region
    _
  $region17: #{cnn_forward.1} parent=0 // pred_fallthru
    _

</llo_original>
